<compile_context>
chip_gen: v7x
topology: tpu7x:2x2x1
jax: 0.10.0
libtpu: 0.0.40
codegen_flags: <defaults>
</compile_context>

<pallas_src>
import jax
import jax.numpy as jnp
from jax.experimental import pallas as pl
from jax.experimental.pallas import tpu as pltpu

EPS = 1e-5
LEAKY_SLOPE = 0.2
LANE = 128
_TILE_CANDIDATES = (8192, 4096, 2048, 1024, 512, 256, 128, 64, 32, 16)


def _round_up(v, m):
    return (v + m - 1) // m * m


def _vmem_capacity_bytes():
    """Physical VMEM per core; conservative fallback = v7x's 64 MiB."""
    try:
        cap = getattr(pltpu.get_tpu_info(), "vmem_capacity_bytes", None)
        if cap:
            return int(cap)
    except Exception:
        pass
    return 64 << 20


def _pick_tm(m, per_row_bytes, fixed_bytes, budget_bytes):
    """Largest candidate M-tile whose working set fits `budget_bytes`.
    Tiles >= m are skipped (when m allows splitting) so the grid has >= 2
    steps and both v7x TensorCores get work on the "parallel" axis."""
    for tm in _TILE_CANDIDATES:
        if tm >= m and m > _TILE_CANDIDATES[-1]:
            continue
        if fixed_bytes + tm * per_row_bytes <= budget_bytes:
            return tm
    return _TILE_CANDIDATES[-1]


def _stats_kernel(p_ref, w_ref, s_ref):
    # p_ref: (TMs, K) bf16 patches, w_ref: (K, CP) bf16, s_ref: (2, CP) f32.
    y = jnp.dot(p_ref[...], w_ref[...], preferred_element_type=jnp.float32)
    s_ref[0:1, :] = jnp.sum(y, axis=0, keepdims=True)       # per-channel sum
    s_ref[1:2, :] = jnp.sum(y * y, axis=0, keepdims=True)   # per-channel sum of squares


def _norm_kernel(p_ref, w_ref, ss_ref, o_ref):
    # p_ref: (TMn, K) bf16, w_ref: (K, CP) bf16,
    # ss_ref: (2, CP) f32 with row 0 = inv_std, row 1 = -mean*inv_std,
    # o_ref: (TMn, CP) f32 (lane-dense).
    y = jnp.dot(p_ref[...], w_ref[...], preferred_element_type=jnp.float32)
    y = y * ss_ref[0:1, :] + ss_ref[1:2, :]       # BatchNorm: one mul + one add
    # Dropout(p=0.0) is Identity.
    o_ref[...] = jnp.where(y > 0, y, LEAKY_SLOPE * y)        # LeakyReLU(0.2)


def _im2col_nhwc(x_nhwc):
    """x_nhwc: (N, H, W, Cin) -> patches (N*Ho*Wo, Cin*16) for 4x4/stride2/pad1.
    The 16 taps are stacked on the LAST axis so the big patches array is built
    contiguously (no XLA transpose of the 4x-amplified stream) with flat column
    index ci*16 + kh*4 + kw, matching weight.reshape(Cout, Cin*4*4)."""
    n, h, w, cin = x_nhwc.shape
    ho, wo = h // 2, w // 2
    xpad = jnp.pad(x_nhwc, ((0, 0), (1, 1), (1, 1), (0, 0)))
    taps = []
    for kh in range(4):
        for kw in range(4):
            taps.append(xpad[:, kh:kh + 2 * ho:2, kw:kw + 2 * wo:2, :])  # (N,Ho,Wo,Cin)
    patches = jnp.stack(taps, axis=-1)                      # (N,Ho,Wo,Cin,16)
    patches = patches.reshape(n * ho * wo, cin * 16)
    return patches, ho, wo


def _run_passes(patches, w2d, m_true, tm_stats, tm_norm, vmem_limit,
                single_buffer_consts):
    m_pad, k = patches.shape
    cp = w2d.shape[1]

    def const_spec(shape):
        idx = lambda i, _s=shape: (0,) * len(_s)
        if single_buffer_consts:
            # index never changes -> single buffer, VMEM saved feeds larger tm.
            return pl.BlockSpec(shape, idx, pipeline_mode=pl.Buffered(1))
        return pl.BlockSpec(shape, idx)

    cparams = pltpu.CompilerParams(dimension_semantics=("parallel",),
                                   vmem_limit_bytes=vmem_limit)

    # Pass 1: per-M-tile partial per-channel sum / sum-of-squares.
    nts = m_pad // tm_stats
    stats_partial = pl.pallas_call(
        _stats_kernel,
        out_shape=jax.ShapeDtypeStruct((nts, 2, cp), jnp.float32),
        grid=(nts,),
        in_specs=[pl.BlockSpec((tm_stats, k), lambda i: (i, 0)),
                  const_spec((k, cp))],
        out_specs=pl.BlockSpec((None, 2, cp), lambda i: (i, 0, 0)),
        compiler_params=cparams,
    )(patches, w2d)

    # Tiny finalize in plain JAX: biased variance, eps=1e-5 (matches PyTorch).
    # NOTE: E[y^2]-E[y]^2 in f32 is fine at these sizes; a shifted/hierarchical
    # combine would be more robust for very large N*Ho*Wo.
    stats = jnp.sum(stats_partial, axis=0)                  # (2, CP) f32
    mean = stats[0:1] * (1.0 / m_true)
    var = jnp.maximum(stats[1:2] * (1.0 / m_true) - mean * mean, 0.0)
    inv_std = jax.lax.rsqrt(var + EPS)
    scale_shift = jnp.concatenate([inv_std, -mean * inv_std], axis=0)  # (2, CP)

    # Pass 2: redo the cheap K=Cin*16 matmul, scale/shift, LeakyReLU,
    # lane-dense f32 store.  Recompute beats store-and-reload while K < 2*CP.
    # TODO(synk): for deep Cin (K > 2*CP), have pass 1 spill pre-BN bf16
    # activations instead of recomputing the matmul in pass 2.
    ntn = m_pad // tm_norm
    out_flat = pl.pallas_call(
        _norm_kernel,
        out_shape=jax.ShapeDtypeStruct((m_pad, cp), jnp.float32),
        grid=(ntn,),
        in_specs=[pl.BlockSpec((tm_norm, k), lambda i: (i, 0)),
                  const_spec((k, cp)),
                  const_spec((2, cp))],
        out_specs=pl.BlockSpec((tm_norm, cp), lambda i: (i, 0)),
        compiler_params=cparams,
    )(patches, w2d, scale_shift)
    return out_flat


def conv4x4_forward(x, weight, bias=None, out_layout="NCHW"):
    """x: (N,Cin,H,W) f32, weight: (Cout,Cin,4,4), bias: (Cout,).
    Returns f32 NCHW (N, Cout, H//2, W//2); out_layout="NHWC" skips the final
    XLA transpose for consumers that accept channels-last."""
    del bias  # provably a no-op under affine=False batch-stat BatchNorm
    n, cin, h, w = x.shape
    cout = weight.shape[0]

    # NHWC once (small), then transpose-free im2col of the big patches stream.
    # TODO(synk): do the im2col gather fully in-kernel (NHWC input in HBM via
    # memory_space=pl.ANY + halo DMA) to avoid materializing patches at all.
    x_nhwc = jnp.transpose(x, (0, 2, 3, 1)).astype(jnp.bfloat16)
    patches, ho, wo = _im2col_nhwc(x_nhwc)
    m, k = patches.shape

    cp = _round_up(cout, LANE)                               # lane-dense channels
    w2d = weight.reshape(cout, k).T.astype(jnp.bfloat16)     # (K, Cout)
    w2d = jnp.pad(w2d, ((0, 0), (0, cp - cout)))             # (K, CP), zero cols

    # Per-generation VMEM sizing: ~3/8 of physical capacity for tiles (capped
    # at 48 MiB), ~3/4 (capped at 96 MiB) for the scoped-VMEM limit.
    cap = _vmem_capacity_bytes()
    budget = min((cap * 3) // 8, 48 << 20)
    vmem_limit = int(min((cap * 3) // 4, 96 << 20))

    w_bytes = k * cp * 2
    # Pass 1 only streams bf16 patches (stats output is tiny) -> larger tile.
    tm_stats = _pick_tm(m, per_row_bytes=2 * (k * 2),
                        fixed_bytes=2 * w_bytes + 2 * (2 * cp * 4),
                        budget_bytes=budget)
    # Pass 2 also double-buffers the (tm, CP) f32 output.
    tm_norm = _pick_tm(m, per_row_bytes=2 * (k * 2 + cp * 4),
                       fixed_bytes=2 * w_bytes + 2 * (2 * cp * 4),
                       budget_bytes=budget)

    # Pad M with zero rows to a common multiple of both tiles: zero rows add
    # nothing to sum/sumsq (mean/var divide by the true m) and are sliced off.
    m_pad = _round_up(m, max(tm_stats, tm_norm))
    if m_pad != m:
        patches = jnp.pad(patches, ((0, m_pad - m), (0, 0)))

    try:
        out_flat = _run_passes(patches, w2d, m, tm_stats, tm_norm, vmem_limit,
                               single_buffer_consts=True)
    except Exception:
        # pipeline_mode=pl.Buffered(1) not supported on this jax version;
        # fall back to default double-buffering of the constant operands.
        out_flat = _run_passes(patches, w2d, m, tm_stats, tm_norm, vmem_limit,
                               single_buffer_consts=False)

    out_nhwc = out_flat[:m, :cout].reshape(n, ho, wo, cout)
    if out_layout == "NHWC":
        return out_nhwc
    # TODO(synk): fuse this NCHW writeback transpose into the consumer.
    return jnp.transpose(out_nhwc, (0, 3, 1, 2))


def _reference(x, weight, bias):
    """Pure-JAX reference (conv + bias + batch-stat BN + LeakyReLU). Conv inputs
    are cast to bf16 to mirror the kernel's matmul precision."""
    y = jax.lax.conv_general_dilated(
        x.astype(jnp.bfloat16), weight.astype(jnp.bfloat16),
        window_strides=(2, 2), padding=((1, 1), (1, 1)),
        dimension_numbers=("NCHW", "OIHW", "NCHW"),
        preferred_element_type=jnp.float32)
    y = y + bias.reshape(1, -1, 1, 1)
    mean = jnp.mean(y, axis=(0, 2, 3), keepdims=True)
    var = jnp.mean((y - mean) ** 2, axis=(0, 2, 3), keepdims=True)
    y = (y - mean) * jax.lax.rsqrt(var + EPS)
    return jnp.where(y > 0, y, LEAKY_SLOPE * y)


if __name__ == "__main__":
    # Small shapes consistent with the module: N=2, Cin=4, H=W=16, Cout=8.
    N, CIN, COUT, H, W = 2, 4, 8, 16, 16

    key = jax.random.PRNGKey(0)
    kx, kw, kb = jax.random.split(key, 3)
    x = jax.random.normal(kx, (N, CIN, H, W), dtype=jnp.float32)

    # Deterministic PyTorch-like init: U(-1/sqrt(fan_in), 1/sqrt(fan_in)).
    fan_in = CIN * 4 * 4
    bound = 1.0 / (fan_in ** 0.5)
    weight = jax.random.uniform(kw, (COUT, CIN, 4, 4), jnp.float32, -bound, bound)
    bias = jax.random.uniform(kb, (COUT,), jnp.float32, -bound, bound)

    out = jax.block_until_ready(conv4x4_forward(x, weight, bias))
    ref = jax.block_until_ready(_reference(x, weight, bias))

    assert out.shape == (N, COUT, H // 2, W // 2), out.shape
    max_err = float(jnp.max(jnp.abs(out - ref)))
    assert jnp.allclose(out, ref, atol=2e-3, rtol=2e-3), max_err

    print("KERNEL_OK")
</pallas_src>

<mosaic_0001>
module attributes {stable_mosaic.version = 11 : i64} {
  func.func @_stats_kernel(%arg0: i32, %arg1: memref<64x64xbf16, #tpu.memory_space<vmem>>, %arg2: memref<64x128xbf16, #tpu.memory_space<vmem>>, %arg3: memref<1x2x128xf32, #tpu.memory_space<vmem>>) attributes {dimension_semantics = [#tpu.dimension_semantics<parallel>], iteration_bounds = array<i64: 2>, scalar_prefetch = 0 : i64, scratch_operands = 0 : i64, tpu.core_type = #tpu.core_type<tc>, window_params = [{transform_indices = @transform_0, window_bounds = array<i64: 64, 64>}, {pipeline_mode = #tpu.pipeline_mode<synchronous>, transform_indices = @transform_1, window_bounds = array<i64: 64, 128>}, {transform_indices = @transform_2, window_bounds = array<i64: 1, 2, 128>}]} {
    %c0 = arith.constant 0 : index
    %c0_0 = arith.constant 0 : index
    %0 = vector.load %arg1[%c0, %c0_0] : memref<64x64xbf16, #tpu.memory_space<vmem>>, vector<64x64xbf16>
    %c0_1 = arith.constant 0 : index
    %c0_2 = arith.constant 0 : index
    %1 = vector.load %arg2[%c0_1, %c0_2] : memref<64x128xbf16, #tpu.memory_space<vmem>>, vector<64x128xbf16>
    %cst = arith.constant dense<0.000000e+00> : vector<64x128xf32>
    %2 = tpu.matmul %0, %1, %cst {dimension_numbers = #tpu.dot_dimension_numbers<[1], [0], [0], [1], [0, 0, 1, 1], [], []>} : vector<64x64xbf16>, vector<64x128xbf16>, vector<64x128xf32> -> vector<64x128xf32>
    %cst_3 = arith.constant dense<0.000000e+00> : vector<128xf32>
    %3 = vector.multi_reduction <add>, %2, %cst_3 [0] : vector<64x128xf32> to vector<128xf32>
    %4 = vector.shape_cast %3 : vector<128xf32> to vector<1x128xf32>
    %c0_4 = arith.constant 0 : index
    %c0_5 = arith.constant 0 : index
    %c0_6 = arith.constant 0 : index
    %5 = vector.load %arg3[%c0_4, %c0_5, %c0_6] : memref<1x2x128xf32, #tpu.memory_space<vmem>>, vector<1x1x128xf32>
    %6 = vector.shape_cast %5 : vector<1x1x128xf32> to vector<1x128xf32>
    %7 = vector.shape_cast %4 : vector<1x128xf32> to vector<1x1x128xf32>
    tpu.vector_store %arg3[%c0_4, %c0_5, %c0_6], %7 {strides = array<i32>} : memref<1x2x128xf32, #tpu.memory_space<vmem>>, vector<1x1x128xf32>,
    %8 = arith.mulf %2, %2 : vector<64x128xf32>
    %cst_7 = arith.constant dense<0.000000e+00> : vector<128xf32>
    %9 = vector.multi_reduction <add>, %8, %cst_7 [0] : vector<64x128xf32> to vector<128xf32>
    %10 = vector.shape_cast %9 : vector<128xf32> to vector<1x128xf32>
    %c0_8 = arith.constant 0 : index
    %c1 = arith.constant 1 : index
    %c0_9 = arith.constant 0 : index
    %11 = vector.load %arg3[%c0_8, %c1, %c0_9] : memref<1x2x128xf32, #tpu.memory_space<vmem>>, vector<1x1x128xf32>
    %12 = vector.shape_cast %11 : vector<1x1x128xf32> to vector<1x128xf32>
    %13 = vector.shape_cast %10 : vector<1x128xf32> to vector<1x1x128xf32>
    tpu.vector_store %arg3[%c0_8, %c1, %c0_9], %13 {strides = array<i32>} : memref<1x2x128xf32, #tpu.memory_space<vmem>>, vector<1x1x128xf32>,
    return
  }
  func.func @transform_0(%arg0: i32) -> (i32, i32) {
    %c0_i32 = arith.constant 0 : i32
    %c0_i32_0 = arith.constant 0 : i32
    return %arg0, %c0_i32 : i32, i32
  }
  func.func @transform_1(%arg0: i32) -> (i32, i32) {
    %c0_i32 = arith.constant 0 : i32
    %c0_i32_0 = arith.constant 0 : i32
    %c0_i32_1 = arith.constant 0 : i32
    return %c0_i32, %c0_i32_0 : i32, i32
  }
  func.func @transform_2(%arg0: i32) -> (i32, i32, i32) {
    %c0_i32 = arith.constant 0 : i32
    %c0_i32_0 = arith.constant 0 : i32
    %c0_i32_1 = arith.constant 0 : i32
    return %arg0, %c0_i32, %c0_i32_0 : i32, i32, i32
  }
}

module attributes {stable_mosaic.version = 11 : i64} {
  func.func @_stats_kernel(%arg0: i32, %arg1: memref<64x64xbf16, #tpu.memory_space<vmem>>, %arg2: memref<64x128xbf16, #tpu.memory_space<vmem>>, %arg3: memref<1x2x128xf32, #tpu.memory_space<vmem>>) attributes {dimension_semantics = [#tpu.dimension_semantics<parallel>], iteration_bounds = array<i64: 2>, scalar_prefetch = 0 : i64, scratch_operands = 0 : i64, tpu.core_type = #tpu.core_type<tc>, window_params = [{transform_indices = @transform_0, window_bounds = array<i64: 64, 64>}, {pipeline_mode = #tpu.pipeline_mode<synchronous>, transform_indices = @transform_1, window_bounds = array<i64: 64, 128>}, {transform_indices = @transform_2, window_bounds = array<i64: 1, 2, 128>}]} {
    %c0 = arith.constant 0 : index
    %c0_0 = arith.constant 0 : index
    %0 = vector.load %arg1[%c0, %c0_0] : memref<64x64xbf16, #tpu.memory_space<vmem>>, vector<64x64xbf16>
    %c0_1 = arith.constant 0 : index
    %c0_2 = arith.constant 0 : index
    %1 = vector.load %arg2[%c0_1, %c0_2] : memref<64x128xbf16, #tpu.memory_space<vmem>>, vector<64x128xbf16>
    %cst = arith.constant dense<0.000000e+00> : vector<64x128xf32>
    %2 = tpu.matmul %0, %1, %cst {dimension_numbers = #tpu.dot_dimension_numbers<[1], [0], [0], [1], [0, 0, 1, 1], [], []>} : vector<64x64xbf16>, vector<64x128xbf16>, vector<64x128xf32> -> vector<64x128xf32>
    %cst_3 = arith.constant dense<0.000000e+00> : vector<128xf32>
    %3 = vector.multi_reduction <add>, %2, %cst_3 [0] : vector<64x128xf32> to vector<128xf32>
    %4 = vector.shape_cast %3 : vector<128xf32> to vector<1x128xf32>
    %c0_4 = arith.constant 0 : index
    %c0_5 = arith.constant 0 : index
    %c0_6 = arith.constant 0 : index
    %5 = vector.load %arg3[%c0_4, %c0_5, %c0_6] : memref<1x2x128xf32, #tpu.memory_space<vmem>>, vector<1x1x128xf32>
    %6 = vector.shape_cast %5 : vector<1x1x128xf32> to vector<1x128xf32>
    %7 = vector.shape_cast %4 : vector<1x128xf32> to vector<1x1x128xf32>
    tpu.vector_store %arg3[%c0_4, %c0_5, %c0_6], %7 {strides = array<i32>} : memref<1x2x128xf32, #tpu.memory_space<vmem>>, vector<1x1x128xf32>,
    %8 = arith.mulf %2, %2 : vector<64x128xf32>
    %cst_7 = arith.constant dense<0.000000e+00> : vector<128xf32>
    %9 = vector.multi_reduction <add>, %8, %cst_7 [0] : vector<64x128xf32> to vector<128xf32>
    %10 = vector.shape_cast %9 : vector<128xf32> to vector<1x128xf32>
    %c0_8 = arith.constant 0 : index
    %c1 = arith.constant 1 : index
    %c0_9 = arith.constant 0 : index
    %11 = vector.load %arg3[%c0_8, %c1, %c0_9] : memref<1x2x128xf32, #tpu.memory_space<vmem>>, vector<1x1x128xf32>
    %12 = vector.shape_cast %11 : vector<1x1x128xf32> to vector<1x128xf32>
    %13 = vector.shape_cast %10 : vector<1x128xf32> to vector<1x1x128xf32>
    tpu.vector_store %arg3[%c0_8, %c1, %c0_9], %13 {strides = array<i32>} : memref<1x2x128xf32, #tpu.memory_space<vmem>>, vector<1x1x128xf32>,
    return
  }
  func.func @transform_0(%arg0: i32) -> (i32, i32) {
    %c0_i32 = arith.constant 0 : i32
    %c0_i32_0 = arith.constant 0 : i32
    return %arg0, %c0_i32 : i32, i32
  }
  func.func @transform_1(%arg0: i32) -> (i32, i32) {
    %c0_i32 = arith.constant 0 : i32
    %c0_i32_0 = arith.constant 0 : i32
    %c0_i32_1 = arith.constant 0 : i32
    return %c0_i32, %c0_i32_0 : i32, i32
  }
  func.func @transform_2(%arg0: i32) -> (i32, i32, i32) {
    %c0_i32 = arith.constant 0 : i32
    %c0_i32_0 = arith.constant 0 : i32
    %c0_i32_1 = arith.constant 0 : i32
    return %arg0, %c0_i32, %c0_i32_0 : i32, i32, i32
  }
}

</mosaic_0001>

<llo_original>
// kernel: tpu_custom_call.1
$region0: #{tpu_custom_call.1}
  #allocation0 [shape = 'u32[]', space=smem, size = 0x4, offset = 0x4, fixed_abs, tag = 'smem constant byte address 0x4 - core index']
  #allocation1 [shape = 'u32[144,128]{1,0:T(1,128)}', space=vmem, size = 0x12000, scoped, tag = 'internal scratch']
  %s0 = inlined_call_operand.vmem [shape: bf16[128,64], index: 0, kind: input, shape index: {}]
  %s1 = inlined_call_operand.vmem [shape: bf16[64,128], index: 1, kind: input, shape index: {}]
  %s2 = inlined_call_operand.hbm [shape: f32[2,2,128], index: 2, kind: output, shape index: {}]
  %s3 = sld [smem:[#allocation0]]
  $region41: #{tpu_custom_call.1} parent=0
    _
  %s5 = ssub.s32 1, %s3
  %s6 = scalar_select 0, %s5, %s3
  $region1: #{tpu_custom_call.1} parent=0
    #allocation2 [shape = 'u8[2048]{0}', space=vmem, size = 0x800, scoped, tag = 'output window, operand 0']
    #allocation3 [shape = 's32[2]{0}', space=sflag, size = 0x8, scoped, tag = 'scoped memory for tpu_custom_call.1']
    %7 = vsyncpa [#allocation3], 0
    %s8 = scalar_lea.sflag [#allocation3], 1
    %9 = vsyncpa %s8, 0
    loop: start=0, step=1, limit=4
    $region2: #{tpu_custom_call.1} parent=1 // loop_pre_header
      _
    $region3: #{tpu_custom_call.1} parent=1 // loop_header
      %s11 = sphi 0, %s15
      %p12 = scmp.ge.s32.totalorder %s11, 4
      %s21 = sphi 0, %s23
      %s24 = sphi 0, %s21
      %s25 = sphi 0, %s24
      %s41 = sphi 0, %s25
      %s45 = sphi 0, %s45
      %s47 = sphi 0, %s45
      %s48 = sphi 0, %s47
      %s62 = sphi 0, %s48
      %s68 = sphi 0, %s70
      %s71 = sphi 0, %s68
      %s72 = sphi 0, %s71
      %s88 = sphi 0, %s72
    $region4: #{tpu_custom_call.1} parent=1 // loop_header_branch
      %14 = sbr.rel (%p12) target = $region8
    $region5: #{tpu_custom_call.1} parent=1 // loop_body
      %s16 = ssub.s32 %s11, 1
      %s17 = ssub.s32 %s11, 2
      %s18 = sadd.s32 %s11, 1
      %s19 = ssub.s32 %s11, %s18
      %p20 = scmp.eq.s32.totalorder %s19, 0
      %s22 = sadd.s32 %s21, 1
      %s23 = scalar_select %p20, %s21, %s22
      %p26 = pneg %p20
      %p27 = scmp.eq.s32.totalorder %s11, 1
      %p28 = por %p26, %p27
      %p29 = scmp.ne.s32.totalorder %s21, %s24
      %p30 = scmp.eq.s32.totalorder %s11, 0
      %p31 = por %p29, %p30
      %p32 = scmp.ne.s32.totalorder %s21, %s24
      %p33 = scmp.eq.s32.totalorder %s16, 1
      %p34 = por %p32, %p33
      %p35 = scmp.ne.s32.totalorder %s24, %s25
      %p36 = scmp.eq.s32.totalorder %s16, 0
      %p37 = por %p35, %p36
      %p38 = scmp.ne.s32.totalorder %s24, %s25
      %p39 = scmp.eq.s32.totalorder %s17, 1
      %p40 = por %p38, %p39
      %p42 = scmp.ne.s32.totalorder %s25, %s41
      %p43 = scmp.eq.s32.totalorder %s17, 0
      %p44 = por %p42, %p43
      %s46 = sadd.s32 %s45, 1
      %p49 = scmp.eq.s32.totalorder %s11, 1
      %p50 = scmp.ne.s32.totalorder %s45, %s47
      %p51 = scmp.eq.s32.totalorder %s11, 0
      %p52 = por %p50, %p51
      %p53 = scmp.ne.s32.totalorder %s45, %s47
      %p54 = scmp.eq.s32.totalorder %s16, 1
      %p55 = por %p53, %p54
      %p56 = scmp.ne.s32.totalorder %s47, %s48
      %p57 = scmp.eq.s32.totalorder %s16, 0
      %p58 = por %p56, %p57
      %p59 = scmp.ne.s32.totalorder %s47, %s48
      %p60 = scmp.eq.s32.totalorder %s17, 1
      %p61 = por %p59, %p60
      %p63 = scmp.ne.s32.totalorder %s48, %s62
      %p64 = scmp.eq.s32.totalorder %s17, 0
      %p65 = por %p63, %p64
      %s66 = ssub.s32 %s11, %s18
      %p67 = scmp.eq.s32.totalorder %s66, 0
      %s69 = sadd.s32 %s68, 1
      %s70 = scalar_select %p67, %s68, %s69
      %p73 = pneg %p67
      %p74 = scmp.eq.s32.totalorder %s11, 1
      %p75 = por %p73, %p74
      %p76 = scmp.ne.s32.totalorder %s68, %s71
      %p77 = scmp.eq.s32.totalorder %s11, 0
      %p78 = por %p76, %p77
      %p79 = scmp.ne.s32.totalorder %s68, %s71
      %p80 = scmp.eq.s32.totalorder %s16, 1
      %p81 = por %p79, %p80
      %p82 = scmp.ne.s32.totalorder %s71, %s72
      %p83 = scmp.eq.s32.totalorder %s16, 0
      %p84 = por %p82, %p83
      %p85 = scmp.ne.s32.totalorder %s71, %s72
      %p86 = scmp.eq.s32.totalorder %s17, 1
      %p87 = por %p85, %p86
      %p89 = scmp.ne.s32.totalorder %s72, %s88
      %p90 = scmp.eq.s32.totalorder %s17, 0
      %p91 = por %p89, %p90
      %p92 = scmp.le.s32.totalorder 1, %s11
      %p93 = scmp.lt.s32.totalorder %s11, 3
      %p94 = pnand %p92, %p93
      %p95 = pneg %p94
      // Predicated region
      $region9: #{tpu_custom_call.1} parent=5 // pred_check
        _
      $region10: #{tpu_custom_call.1} parent=5 // pred_check_branch
        %97 = sbr.rel (%p94) target = $region12
      $region11: #{tpu_custom_call.1} parent=5 // pred_region
        %s98 = ssub.s32 %s11, 1
        // Predicated region
        $region13: #{tpu_custom_call.1} parent=11 // pred_check
          %p99 = pneg %p58
        $region14: #{tpu_custom_call.1} parent=11 // pred_check_branch
          %101 = sbr.rel (%p99) target = $region16
        $region15: #{tpu_custom_call.1} parent=11 // pred_region
          _
        $region16: #{tpu_custom_call.1} parent=11 // pred_fallthru
          _
      $region12: #{tpu_custom_call.1} parent=5 // pred_fallthru
        _
      %p102 = scmp.lt.s32.totalorder %s11, 2
      // Predicated region
      $region17: #{tpu_custom_call.1} parent=5 // pred_check
        %p103 = pneg %p102
      $region18: #{tpu_custom_call.1} parent=5 // pred_check_branch
        %105 = sbr.rel (%p103) target = $region20
      $region19: #{tpu_custom_call.1} parent=5 // pred_region
        // Predicated region
        $region21: #{tpu_custom_call.1} parent=19 // pred_check
          %p106 = pneg %p31
        $region22: #{tpu_custom_call.1} parent=19 // pred_check_branch
          %108 = sbr.rel (%p106) target = $region24
        $region23: #{tpu_custom_call.1} parent=19 // pred_region
          %s109 = smul.u32 8, %s11
          %p110 = scmp.lt.s32.totalorder %s109, 15
          %s111 = scalar_select %p110, %s109, 15
          %s112 = smul.addr %s111, 4
          %s113 = scalar_lea.vmem %s0, %s112
          %s114 = smul.u32 8, %s11
        $region24: #{tpu_custom_call.1} parent=19 // pred_fallthru
          _
      $region20: #{tpu_custom_call.1} parent=5 // pred_fallthru
        _
      %p115 = scmp.le.s32.totalorder 1, %s11
      %p116 = scmp.lt.s32.totalorder %s11, 3
      %p117 = pnand %p115, %p116
      %p118 = pneg %p117
      // Predicated region
      $region25: #{tpu_custom_call.1} parent=5 // pred_check
        _
      $region26: #{tpu_custom_call.1} parent=5 // pred_check_branch
        %120 = sbr.rel (%p117) target = $region28
      $region27: #{tpu_custom_call.1} parent=5 // pred_region
        %s121 = ssub.s32 %s11, 1
        %s122 = smul.u32 8, %s16
        %p123 = scmp.lt.s32.totalorder %s122, 15
        %s124 = scalar_select %p123, %s122, 15
        %s125 = smul.addr %s124, 4
        %s126 = scalar_lea.vmem %s0, %s125
        %p127 = pneg %p37
        %p128 = pneg %p34
        %p129 = pneg %p58
        %p130 = pneg %p55
        %p131 = pneg %p84
        %p132 = pneg %p81
        %s133 = sand.u32 %s71, 1
        %s134 = scalar_lea.sflag [#allocation3], %s133
        %s135 = sand.u32 %s71, 1
        %s136 = smul.addr %s135, 2
        %s137 = scalar_lea.vmem [#allocation2], %s136
        %s138 = smul.u32 8, %s16
        %p139 = scmp.lt.s32.totalorder %s138, 15
        %s140 = scalar_select %p139, %s138, 15
        %s141 = smul.addr %s140, 4
        %s142 = scalar_lea.vmem %s0, %s141
        %s143 = smul.u32 8, %s16
        %v145 = vld [vmem:[%s142] sm:$0xf]
        %v146 = vld [vmem:[%s142 + $0x4] sm:$0xf]
        %v147 = vld [vmem:[%s142 + $0x8] sm:$0xf]
        %v148 = vld [vmem:[%s142 + $0xc] sm:$0xf]
        %v149 = vld [vmem:[%s142 + $0x10] sm:$0xf]
        %v150 = vld [vmem:[%s142 + $0x14] sm:$0xf]
        %v151 = vld [vmem:[%s142 + $0x18] sm:$0xf]
        %v152 = vld [vmem:[%s142 + $0x1c] sm:$0xf]
        %v153 = vld [vmem:[%s1] sm:$0xf]
        %v154 = vld [vmem:[%s1 + $0x4] sm:$0xf]
        %v155 = vld [vmem:[%s1 + $0x8] sm:$0xf]
        %v156 = vld [vmem:[%s1 + $0xc] sm:$0xf]
        %v157 = vld [vmem:[%s1 + $0x10] sm:$0xf]
        %v158 = vld [vmem:[%s1 + $0x14] sm:$0xf]
        %v159 = vld [vmem:[%s1 + $0x18] sm:$0xf]
        %v160 = vld [vmem:[%s1 + $0x1c] sm:$0xf]
        %v169 = vunpack.c.l.b16 %v145
        %v170 = vunpack.c.l.b16 %v146
        %v171 = vunpack.c.l.b16 %v147
        %v172 = vunpack.c.l.b16 %v148
        %v173 = vunpack.c.l.b16 %v149
        %v174 = vunpack.c.l.b16 %v150
        %v175 = vunpack.c.l.b16 %v151
        %v176 = vunpack.c.l.b16 %v152
        %v177 = vpack.c.b16 %v170, %v169
        %v178 = vpack.c.b16 %v172, %v171
        %v179 = vpack.c.b16 %v174, %v173
        %v180 = vpack.c.b16 %v176, %v175
        %v189 = vunpack.c.l.b16 %v153
        %v190 = vunpack.c.l.b16 %v154
        %v191 = vunpack.c.l.b16 %v155
        %v192 = vunpack.c.l.b16 %v156
        %v193 = vunpack.c.l.b16 %v157
        %v194 = vunpack.c.l.b16 %v158
        %v195 = vunpack.c.l.b16 %v159
        %v196 = vunpack.c.l.b16 %v160
        %v197 = vpack.c.b16 %v190, %v189
        %v198 = vpack.c.b16 %v192, %v191
        %v199 = vpack.c.b16 %v194, %v193
        %v200 = vpack.c.b16 %v196, %v195
        %vm205 = vcmask 523264
        %v207 = vsel %vm205, %v177, 0
        %v210 = vsel %vm205, %v178, 0
        %v213 = vsel %vm205, %v179, 0
        %v216 = vsel %vm205, %v180, 0
        %218 = vmatprep.subr.bf16.mxu0 0
        %219 = vmatpush1.bf16.msra.mxu0 %v197
        %220 = vmatprep.subr.bf16.mxu0 0
        %221 = vmatpush1.bf16.msra.mxu0 %v198
        %222 = vmatprep.subr.bf16.mxu0 0
        %223 = vmatpush1.bf16.msra.mxu0 %v199
        %224 = vmatprep.subr.bf16.mxu0 0
        %225 = vmatpush1.bf16.msra.mxu0 %v200
        %226 = vmatprep.subr.bf16.mxu0 0
        %227 = vmatpush1.bf16.msra.mxu0 0
        %228 = vmatprep.subr.bf16.mxu0 0
        %229 = vmatpush1.bf16.msra.mxu0 0
        %230 = vmatprep.subr.bf16.mxu0 0
        %231 = vmatpush1.bf16.msra.mxu0 0
        %232 = vmatprep.subr.bf16.mxu0 0
        %233 = vmatpush1.bf16.msra.mxu0 0
        %234 = vmatprep.subr.bf16.mxu0 0
        %235 = vmatpush1.bf16.msra.mxu0 0
        %236 = vmatprep.subr.bf16.mxu0 0
        %237 = vmatpush1.bf16.msra.mxu0 0
        %238 = vmatprep.subr.bf16.mxu0 0
        %239 = vmatpush1.bf16.msra.mxu0 0
        %240 = vmatprep.subr.bf16.mxu0 0
        %241 = vmatpush1.bf16.msra.mxu0 0
        %242 = vmatprep.subr.bf16.mxu0 0
        %243 = vmatpush1.bf16.msra.mxu0 0
        %244 = vmatprep.subr.bf16.mxu0 0
        %245 = vmatpush1.bf16.msra.mxu0 0
        %246 = vmatprep.subr.bf16.mxu0 0
        %247 = vmatpush1.bf16.msra.mxu0 0
        %248 = vmatprep.subr.bf16.mxu0 0
        %249 = vmatpush1.bf16.msra.mxu0 0
        %250 = vmatprep.mubr.bf16.mxu0 0
        %251 = vmatmul.mubr.bf16.gmra.mrb[0].mxu0 %v207
        %v252 = vpop.f32.mrb[0].mxu0
        %v253 = vadd.f32 0.0, %v252
        %v254 = vpop.f32.mrb[0].mxu0
        %v255 = vpop.f32.mrb[0].mxu0
        %v256 = vadd.f32 0.0, %v255
        %v257 = vpop.f32.mrb[0].mxu0
        %258 = vmatprep.mubr.bf16.mxu0 0
        %259 = vmatmul.mubr.bf16.gmra.mrb[0].mxu0 %v210
        %v260 = vpop.f32.mrb[0].mxu0
        %v261 = vadd.f32 0.0, %v260
        %v262 = vpop.f32.mrb[0].mxu0
        %v263 = vpop.f32.mrb[0].mxu0
        %v264 = vadd.f32 0.0, %v263
        %v265 = vpop.f32.mrb[0].mxu0
        %266 = vmatprep.mubr.bf16.mxu0 0
        %267 = vmatmul.mubr.bf16.gmra.mrb[0].mxu0 %v213
        %v268 = vpop.f32.mrb[0].mxu0
        %v269 = vadd.f32 0.0, %v268
        %v270 = vpop.f32.mrb[0].mxu0
        %v271 = vpop.f32.mrb[0].mxu0
        %v272 = vadd.f32 0.0, %v271
        %v273 = vpop.f32.mrb[0].mxu0
        %274 = vmatprep.mubr.bf16.mxu0 0
        %275 = vmatmul.mubr.bf16.gmra.mrb[0].mxu0 %v216
        %v276 = vpop.f32.mrb[0].mxu0
        %v277 = vadd.f32 0.0, %v276
        %v278 = vpop.f32.mrb[0].mxu0
        %v279 = vpop.f32.mrb[0].mxu0
        %v280 = vadd.f32 0.0, %v279
        %v281 = vpop.f32.mrb[0].mxu0
        %282 = vdwg.mxu0
        %v283 = vadd.f32 %v253, %v256
        %v284 = vadd.f32 %v283, %v261
        %v285 = vadd.f32 %v284, %v264
        %v286 = vadd.f32 %v285, %v269
        %v287 = vadd.f32 %v286, %v272
        %v288 = vadd.f32 %v287, %v277
        %v289 = vadd.f32 %v288, %v280
        %v290 = vrot.slane %v289, 4
        %v291 = vadd.f32 %v289, %v290
        %v292 = vrot.slane %v291, 2
        %v293 = vadd.f32 %v291, %v292
        %v294 = vrot.slane %v293, 1
        %v295 = vadd.f32 %v293, %v294
        %296 = vst [vmem:[%s137] sm:$0x1] %v295
        %v297 = vmul.f32 %v253, %v253
        %v298 = vmul.f32 %v256, %v256
        %v299 = vmul.f32 %v261, %v261
        %v300 = vmul.f32 %v264, %v264
        %v301 = vmul.f32 %v269, %v269
        %v302 = vmul.f32 %v272, %v272
        %v303 = vmul.f32 %v277, %v277
        %v304 = vmul.f32 %v280, %v280
        %v305 = vadd.f32 %v297, %v298
        %v306 = vadd.f32 %v305, %v299
        %v307 = vadd.f32 %v306, %v300
        %v308 = vadd.f32 %v307, %v301
        %v309 = vadd.f32 %v308, %v302
        %v310 = vadd.f32 %v309, %v303
        %v311 = vadd.f32 %v310, %v304
        %v312 = vrot.slane %v311, 4
        %v313 = vadd.f32 %v311, %v312
        %v314 = vrot.slane %v313, 2
        %v315 = vadd.f32 %v313, %v314
        %v316 = vrot.slane %v315, 1
        %v317 = vadd.f32 %v315, %v316
        %318 = vst [vmem:[%s137 + $0x1] sm:$0x1] %v317
        %s319 = sand.u32 %s71, 1
        %s320 = scalar_lea.sflag [#allocation3], %s319
        %s321 = sand.u32 %s71, 1
        %s322 = smul.addr %s321, 2
        %s323 = scalar_lea.vmem [#allocation2], %s322
        // Predicated region
        $region29: #{tpu_custom_call.1} parent=27 // pred_check
          %p324 = pneg %p81
        $region30: #{tpu_custom_call.1} parent=27 // pred_check_branch
          %326 = sbr.rel (%p324) target = $region32
        $region31: #{tpu_custom_call.1} parent=27 // pred_region
          %s328 = ssub.s32 32, 32
          %329 = vsyncadd %s320, %s328
          %s330 = smul.addr %s16, 32
          %s331 = scalar_lea.hbm %s2, %s330
          %s333 = sshll.u32 %s323, 4
          %s334 = int_to_ptr.vmem [resolvable:$true] %s333
          %336 = dma.vmem_to_hbm [thread:$0]  %s334, 32, %s331, %s320
        $region32: #{tpu_custom_call.1} parent=27 // pred_fallthru
          _
      $region28: #{tpu_custom_call.1} parent=5 // pred_fallthru
        _
      %p337 = scmp.le.s32.totalorder 2, %s11
      // Predicated region
      $region33: #{tpu_custom_call.1} parent=5 // pred_check
        %p338 = pneg %p337
      $region34: #{tpu_custom_call.1} parent=5 // pred_check_branch
        %340 = sbr.rel (%p338) target = $region36
      $region35: #{tpu_custom_call.1} parent=5 // pred_region
        %s341 = ssub.s32 %s11, 2
        // Predicated region
        $region37: #{tpu_custom_call.1} parent=35 // pred_check
          %p342 = pneg %p87
        $region38: #{tpu_custom_call.1} parent=35 // pred_check_branch
          %344 = sbr.rel (%p342) target = $region40
        $region39: #{tpu_custom_call.1} parent=35 // pred_region
          %s345 = sand.u32 %s72, 1
          %s346 = scalar_lea.sflag [#allocation3], %s345
          %s347 = sand.u32 %s72, 1
          %s348 = smul.addr %s347, 2
          %s349 = scalar_lea.vmem [#allocation2], %s348
          %350 = dma.done %s346, 32
        $region40: #{tpu_custom_call.1} parent=35 // pred_fallthru
          _
      $region36: #{tpu_custom_call.1} parent=5 // pred_fallthru
        _
    $region6: #{tpu_custom_call.1} parent=1 // loop_footer
      %s15 = sadd.s32 1, %s11
    $region7: #{tpu_custom_call.1} parent=1 // loop_footer_branch
      %10 = sbr.rel target = $region3
    $region8: #{tpu_custom_call.1} parent=1 // loop_exit
      _
    %351 = vsyncpa [#allocation3], 1
    %s352 = scalar_lea.sflag [#allocation3], 1
    %353 = vsyncpa %s352, 1

// kernel: tpu_custom_call.1
$region0: #{tpu_custom_call.1}
  #allocation0 [shape = 'u32[]', space=smem, size = 0x4, offset = 0x4, fixed_abs, tag = 'smem constant byte address 0x4 - core index']
  #allocation1 [shape = 'u32[144,128]{1,0:T(1,128)}', space=vmem, size = 0x12000, scoped, tag = 'internal scratch']
  %s0 = inlined_call_operand.vmem [shape: bf16[128,64], index: 0, kind: input, shape index: {}]
  %s1 = inlined_call_operand.vmem [shape: bf16[64,128], index: 1, kind: input, shape index: {}]
  %s2 = inlined_call_operand.hbm [shape: f32[2,2,128], index: 2, kind: output, shape index: {}]
  %s3 = sld [smem:[#allocation0]]
  $region41: #{tpu_custom_call.1} parent=0
    _
  %s5 = ssub.s32 1, %s3
  %s6 = scalar_select 0, %s5, %s3
  $region1: #{tpu_custom_call.1} parent=0
    #allocation2 [shape = 'u8[2048]{0}', space=vmem, size = 0x800, scoped, tag = 'output window, operand 0']
    #allocation3 [shape = 's32[2]{0}', space=sflag, size = 0x8, scoped, tag = 'scoped memory for tpu_custom_call.1']
    %7 = vsyncpa [#allocation3], 0
    %s8 = scalar_lea.sflag [#allocation3], 1
    %9 = vsyncpa %s8, 0
    loop: start=0, step=1, limit=4
    $region2: #{tpu_custom_call.1} parent=1 // loop_pre_header
      _
    $region3: #{tpu_custom_call.1} parent=1 // loop_header
      %s11 = sphi 0, %s15
      %p12 = scmp.ge.s32.totalorder %s11, 4
      %s21 = sphi 0, %s23
      %s24 = sphi 0, %s21
      %s25 = sphi 0, %s24
      %s41 = sphi 0, %s25
      %s45 = sphi 0, %s45
      %s47 = sphi 0, %s45
      %s48 = sphi 0, %s47
      %s62 = sphi 0, %s48
      %s68 = sphi 0, %s70
      %s71 = sphi 0, %s68
      %s72 = sphi 0, %s71
      %s88 = sphi 0, %s72
    $region4: #{tpu_custom_call.1} parent=1 // loop_header_branch
      %14 = sbr.rel (%p12) target = $region8
    $region5: #{tpu_custom_call.1} parent=1 // loop_body
      %s16 = ssub.s32 %s11, 1
      %s17 = ssub.s32 %s11, 2
      %s18 = sadd.s32 %s11, 1
      %s19 = ssub.s32 %s11, %s18
      %p20 = scmp.eq.s32.totalorder %s19, 0
      %s22 = sadd.s32 %s21, 1
      %s23 = scalar_select %p20, %s21, %s22
      %p26 = pneg %p20
      %p27 = scmp.eq.s32.totalorder %s11, 1
      %p28 = por %p26, %p27
      %p29 = scmp.ne.s32.totalorder %s21, %s24
      %p30 = scmp.eq.s32.totalorder %s11, 0
      %p31 = por %p29, %p30
      %p32 = scmp.ne.s32.totalorder %s21, %s24
      %p33 = scmp.eq.s32.totalorder %s16, 1
      %p34 = por %p32, %p33
      %p35 = scmp.ne.s32.totalorder %s24, %s25
      %p36 = scmp.eq.s32.totalorder %s16, 0
      %p37 = por %p35, %p36
      %p38 = scmp.ne.s32.totalorder %s24, %s25
      %p39 = scmp.eq.s32.totalorder %s17, 1
      %p40 = por %p38, %p39
      %p42 = scmp.ne.s32.totalorder %s25, %s41
      %p43 = scmp.eq.s32.totalorder %s17, 0
      %p44 = por %p42, %p43
      %s46 = sadd.s32 %s45, 1
      %p49 = scmp.eq.s32.totalorder %s11, 1
      %p50 = scmp.ne.s32.totalorder %s45, %s47
      %p51 = scmp.eq.s32.totalorder %s11, 0
      %p52 = por %p50, %p51
      %p53 = scmp.ne.s32.totalorder %s45, %s47
      %p54 = scmp.eq.s32.totalorder %s16, 1
      %p55 = por %p53, %p54
      %p56 = scmp.ne.s32.totalorder %s47, %s48
      %p57 = scmp.eq.s32.totalorder %s16, 0
      %p58 = por %p56, %p57
      %p59 = scmp.ne.s32.totalorder %s47, %s48
      %p60 = scmp.eq.s32.totalorder %s17, 1
      %p61 = por %p59, %p60
      %p63 = scmp.ne.s32.totalorder %s48, %s62
      %p64 = scmp.eq.s32.totalorder %s17, 0
      %p65 = por %p63, %p64
      %s66 = ssub.s32 %s11, %s18
      %p67 = scmp.eq.s32.totalorder %s66, 0
      %s69 = sadd.s32 %s68, 1
      %s70 = scalar_select %p67, %s68, %s69
      %p73 = pneg %p67
      %p74 = scmp.eq.s32.totalorder %s11, 1
      %p75 = por %p73, %p74
      %p76 = scmp.ne.s32.totalorder %s68, %s71
      %p77 = scmp.eq.s32.totalorder %s11, 0
      %p78 = por %p76, %p77
      %p79 = scmp.ne.s32.totalorder %s68, %s71
      %p80 = scmp.eq.s32.totalorder %s16, 1
      %p81 = por %p79, %p80
      %p82 = scmp.ne.s32.totalorder %s71, %s72
      %p83 = scmp.eq.s32.totalorder %s16, 0
      %p84 = por %p82, %p83
      %p85 = scmp.ne.s32.totalorder %s71, %s72
      %p86 = scmp.eq.s32.totalorder %s17, 1
      %p87 = por %p85, %p86
      %p89 = scmp.ne.s32.totalorder %s72, %s88
      %p90 = scmp.eq.s32.totalorder %s17, 0
      %p91 = por %p89, %p90
      %p92 = scmp.le.s32.totalorder 1, %s11
      %p93 = scmp.lt.s32.totalorder %s11, 3
      %p94 = pnand %p92, %p93
      %p95 = pneg %p94
      // Predicated region
      $region9: #{tpu_custom_call.1} parent=5 // pred_check
        _
      $region10: #{tpu_custom_call.1} parent=5 // pred_check_branch
        %97 = sbr.rel (%p94) target = $region12
      $region11: #{tpu_custom_call.1} parent=5 // pred_region
        %s98 = ssub.s32 %s11, 1
        // Predicated region
        $region13: #{tpu_custom_call.1} parent=11 // pred_check
          %p99 = pneg %p58
        $region14: #{tpu_custom_call.1} parent=11 // pred_check_branch
          %101 = sbr.rel (%p99) target = $region16
        $region15: #{tpu_custom_call.1} parent=11 // pred_region
          _
        $region16: #{tpu_custom_call.1} parent=11 // pred_fallthru
          _
      $region12: #{tpu_custom_call.1} parent=5 // pred_fallthru
        _
      %p102 = scmp.lt.s32.totalorder %s11, 2
      // Predicated region
      $region17: #{tpu_custom_call.1} parent=5 // pred_check
        %p103 = pneg %p102
      $region18: #{tpu_custom_call.1} parent=5 // pred_check_branch
        %105 = sbr.rel (%p103) target = $region20
      $region19: #{tpu_custom_call.1} parent=5 // pred_region
        // Predicated region
        $region21: #{tpu_custom_call.1} parent=19 // pred_check
          %p106 = pneg %p31
        $region22: #{tpu_custom_call.1} parent=19 // pred_check_branch
          %108 = sbr.rel (%p106) target = $region24
        $region23: #{tpu_custom_call.1} parent=19 // pred_region
          %s109 = smul.u32 8, %s11
          %p110 = scmp.lt.s32.totalorder %s109, 15
          %s111 = scalar_select %p110, %s109, 15
          %s112 = smul.addr %s111, 4
          %s113 = scalar_lea.vmem %s0, %s112
          %s114 = smul.u32 8, %s11
        $region24: #{tpu_custom_call.1} parent=19 // pred_fallthru
          _
      $region20: #{tpu_custom_call.1} parent=5 // pred_fallthru
        _
      %p115 = scmp.le.s32.totalorder 1, %s11
      %p116 = scmp.lt.s32.totalorder %s11, 3
      %p117 = pnand %p115, %p116
      %p118 = pneg %p117
      // Predicated region
      $region25: #{tpu_custom_call.1} parent=5 // pred_check
        _
      $region26: #{tpu_custom_call.1} parent=5 // pred_check_branch
        %120 = sbr.rel (%p117) target = $region28
      $region27: #{tpu_custom_call.1} parent=5 // pred_region
        %s121 = ssub.s32 %s11, 1
        %s122 = smul.u32 8, %s16
        %p123 = scmp.lt.s32.totalorder %s122, 15
        %s124 = scalar_select %p123, %s122, 15
        %s125 = smul.addr %s124, 4
        %s126 = scalar_lea.vmem %s0, %s125
        %p127 = pneg %p37
        %p128 = pneg %p34
        %p129 = pneg %p58
        %p130 = pneg %p55
        %p131 = pneg %p84
        %p132 = pneg %p81
        %s133 = sand.u32 %s71, 1
        %s134 = scalar_lea.sflag [#allocation3], %s133
        %s135 = sand.u32 %s71, 1
        %s136 = smul.addr %s135, 2
        %s137 = scalar_lea.vmem [#allocation2], %s136
        %s138 = smul.u32 8, %s16
        %p139 = scmp.lt.s32.totalorder %s138, 15
        %s140 = scalar_select %p139, %s138, 15
        %s141 = smul.addr %s140, 4
        %s142 = scalar_lea.vmem %s0, %s141
        %s143 = smul.u32 8, %s16
        %v145 = vld [vmem:[%s142] sm:$0xf]
        %v146 = vld [vmem:[%s142 + $0x4] sm:$0xf]
        %v147 = vld [vmem:[%s142 + $0x8] sm:$0xf]
        %v148 = vld [vmem:[%s142 + $0xc] sm:$0xf]
        %v149 = vld [vmem:[%s142 + $0x10] sm:$0xf]
        %v150 = vld [vmem:[%s142 + $0x14] sm:$0xf]
        %v151 = vld [vmem:[%s142 + $0x18] sm:$0xf]
        %v152 = vld [vmem:[%s142 + $0x1c] sm:$0xf]
        %v153 = vld [vmem:[%s1] sm:$0xf]
        %v154 = vld [vmem:[%s1 + $0x4] sm:$0xf]
        %v155 = vld [vmem:[%s1 + $0x8] sm:$0xf]
        %v156 = vld [vmem:[%s1 + $0xc] sm:$0xf]
        %v157 = vld [vmem:[%s1 + $0x10] sm:$0xf]
        %v158 = vld [vmem:[%s1 + $0x14] sm:$0xf]
        %v159 = vld [vmem:[%s1 + $0x18] sm:$0xf]
        %v160 = vld [vmem:[%s1 + $0x1c] sm:$0xf]
        %v169 = vunpack.c.l.b16 %v145
        %v170 = vunpack.c.l.b16 %v146
        %v171 = vunpack.c.l.b16 %v147
        %v172 = vunpack.c.l.b16 %v148
        %v173 = vunpack.c.l.b16 %v149
        %v174 = vunpack.c.l.b16 %v150
        %v175 = vunpack.c.l.b16 %v151
        %v176 = vunpack.c.l.b16 %v152
        %v177 = vpack.c.b16 %v170, %v169
        %v178 = vpack.c.b16 %v172, %v171
        %v179 = vpack.c.b16 %v174, %v173
        %v180 = vpack.c.b16 %v176, %v175
        %v189 = vunpack.c.l.b16 %v153
        %v190 = vunpack.c.l.b16 %v154
        %v191 = vunpack.c.l.b16 %v155
        %v192 = vunpack.c.l.b16 %v156
        %v193 = vunpack.c.l.b16 %v157
        %v194 = vunpack.c.l.b16 %v158
        %v195 = vunpack.c.l.b16 %v159
        %v196 = vunpack.c.l.b16 %v160
        %v197 = vpack.c.b16 %v190, %v189
        %v198 = vpack.c.b16 %v192, %v191
        %v199 = vpack.c.b16 %v194, %v193
        %v200 = vpack.c.b16 %v196, %v195
        %vm205 = vcmask 523264
        %v207 = vsel %vm205, %v177, 0
        %v210 = vsel %vm205, %v178, 0
        %v213 = vsel %vm205, %v179, 0
        %v216 = vsel %vm205, %v180, 0
        %218 = vmatprep.subr.bf16.mxu0 0
        %219 = vmatpush1.bf16.msra.mxu0 %v197
        %220 = vmatprep.subr.bf16.mxu0 0
        %221 = vmatpush1.bf16.msra.mxu0 %v198
        %222 = vmatprep.subr.bf16.mxu0 0
        %223 = vmatpush1.bf16.msra.mxu0 %v199
        %224 = vmatprep.subr.bf16.mxu0 0
        %225 = vmatpush1.bf16.msra.mxu0 %v200
        %226 = vmatprep.subr.bf16.mxu0 0
        %227 = vmatpush1.bf16.msra.mxu0 0
        %228 = vmatprep.subr.bf16.mxu0 0
        %229 = vmatpush1.bf16.msra.mxu0 0
        %230 = vmatprep.subr.bf16.mxu0 0
        %231 = vmatpush1.bf16.msra.mxu0 0
        %232 = vmatprep.subr.bf16.mxu0 0
        %233 = vmatpush1.bf16.msra.mxu0 0
        %234 = vmatprep.subr.bf16.mxu0 0
        %235 = vmatpush1.bf16.msra.mxu0 0
        %236 = vmatprep.subr.bf16.mxu0 0
        %237 = vmatpush1.bf16.msra.mxu0 0
        %238 = vmatprep.subr.bf16.mxu0 0
        %239 = vmatpush1.bf16.msra.mxu0 0
        %240 = vmatprep.subr.bf16.mxu0 0
        %241 = vmatpush1.bf16.msra.mxu0 0
        %242 = vmatprep.subr.bf16.mxu0 0
        %243 = vmatpush1.bf16.msra.mxu0 0
        %244 = vmatprep.subr.bf16.mxu0 0
        %245 = vmatpush1.bf16.msra.mxu0 0
        %246 = vmatprep.subr.bf16.mxu0 0
        %247 = vmatpush1.bf16.msra.mxu0 0
        %248 = vmatprep.subr.bf16.mxu0 0
        %249 = vmatpush1.bf16.msra.mxu0 0
        %250 = vmatprep.mubr.bf16.mxu0 0
        %251 = vmatmul.mubr.bf16.gmra.mrb[0].mxu0 %v207
        %v252 = vpop.f32.mrb[0].mxu0
        %v253 = vadd.f32 0.0, %v252
        %v254 = vpop.f32.mrb[0].mxu0
        %v255 = vpop.f32.mrb[0].mxu0
        %v256 = vadd.f32 0.0, %v255
        %v257 = vpop.f32.mrb[0].mxu0
        %258 = vmatprep.mubr.bf16.mxu0 0
        %259 = vmatmul.mubr.bf16.gmra.mrb[0].mxu0 %v210
        %v260 = vpop.f32.mrb[0].mxu0
        %v261 = vadd.f32 0.0, %v260
        %v262 = vpop.f32.mrb[0].mxu0
        %v263 = vpop.f32.mrb[0].mxu0
        %v264 = vadd.f32 0.0, %v263
        %v265 = vpop.f32.mrb[0].mxu0
        %266 = vmatprep.mubr.bf16.mxu0 0
        %267 = vmatmul.mubr.bf16.gmra.mrb[0].mxu0 %v213
        %v268 = vpop.f32.mrb[0].mxu0
        %v269 = vadd.f32 0.0, %v268
        %v270 = vpop.f32.mrb[0].mxu0
        %v271 = vpop.f32.mrb[0].mxu0
        %v272 = vadd.f32 0.0, %v271
        %v273 = vpop.f32.mrb[0].mxu0
        %274 = vmatprep.mubr.bf16.mxu0 0
        %275 = vmatmul.mubr.bf16.gmra.mrb[0].mxu0 %v216
        %v276 = vpop.f32.mrb[0].mxu0
        %v277 = vadd.f32 0.0, %v276
        %v278 = vpop.f32.mrb[0].mxu0
        %v279 = vpop.f32.mrb[0].mxu0
        %v280 = vadd.f32 0.0, %v279
        %v281 = vpop.f32.mrb[0].mxu0
        %282 = vdwg.mxu0
        %v283 = vadd.f32 %v253, %v256
        %v284 = vadd.f32 %v283, %v261
        %v285 = vadd.f32 %v284, %v264
        %v286 = vadd.f32 %v285, %v269
        %v287 = vadd.f32 %v286, %v272
        %v288 = vadd.f32 %v287, %v277
        %v289 = vadd.f32 %v288, %v280
        %v290 = vrot.slane %v289, 4
        %v291 = vadd.f32 %v289, %v290
        %v292 = vrot.slane %v291, 2
        %v293 = vadd.f32 %v291, %v292
        %v294 = vrot.slane %v293, 1
        %v295 = vadd.f32 %v293, %v294
        %296 = vst [vmem:[%s137] sm:$0x1] %v295
        %v297 = vmul.f32 %v253, %v253
        %v298 = vmul.f32 %v256, %v256
        %v299 = vmul.f32 %v261, %v261
        %v300 = vmul.f32 %v264, %v264
        %v301 = vmul.f32 %v269, %v269
        %v302 = vmul.f32 %v272, %v272
        %v303 = vmul.f32 %v277, %v277
        %v304 = vmul.f32 %v280, %v280
        %v305 = vadd.f32 %v297, %v298
        %v306 = vadd.f32 %v305, %v299
        %v307 = vadd.f32 %v306, %v300
        %v308 = vadd.f32 %v307, %v301
        %v309 = vadd.f32 %v308, %v302
        %v310 = vadd.f32 %v309, %v303
        %v311 = vadd.f32 %v310, %v304
        %v312 = vrot.slane %v311, 4
        %v313 = vadd.f32 %v311, %v312
        %v314 = vrot.slane %v313, 2
        %v315 = vadd.f32 %v313, %v314
        %v316 = vrot.slane %v315, 1
        %v317 = vadd.f32 %v315, %v316
        %318 = vst [vmem:[%s137 + $0x1] sm:$0x1] %v317
        %s319 = sand.u32 %s71, 1
        %s320 = scalar_lea.sflag [#allocation3], %s319
        %s321 = sand.u32 %s71, 1
        %s322 = smul.addr %s321, 2
        %s323 = scalar_lea.vmem [#allocation2], %s322
        // Predicated region
        $region29: #{tpu_custom_call.1} parent=27 // pred_check
          %p324 = pneg %p81
        $region30: #{tpu_custom_call.1} parent=27 // pred_check_branch
          %326 = sbr.rel (%p324) target = $region32
        $region31: #{tpu_custom_call.1} parent=27 // pred_region
          %s328 = ssub.s32 32, 32
          %329 = vsyncadd %s320, %s328
          %s330 = smul.addr %s16, 32
          %s331 = scalar_lea.hbm %s2, %s330
          %s333 = sshll.u32 %s323, 4
          %s334 = int_to_ptr.vmem [resolvable:$true] %s333
          %336 = dma.vmem_to_hbm [thread:$0]  %s334, 32, %s331, %s320
        $region32: #{tpu_custom_call.1} parent=27 // pred_fallthru
          _
      $region28: #{tpu_custom_call.1} parent=5 // pred_fallthru
        _
      %p337 = scmp.le.s32.totalorder 2, %s11
      // Predicated region
      $region33: #{tpu_custom_call.1} parent=5 // pred_check
        %p338 = pneg %p337
      $region34: #{tpu_custom_call.1} parent=5 // pred_check_branch
        %340 = sbr.rel (%p338) target = $region36
      $region35: #{tpu_custom_call.1} parent=5 // pred_region
        %s341 = ssub.s32 %s11, 2
        // Predicated region
        $region37: #{tpu_custom_call.1} parent=35 // pred_check
          %p342 = pneg %p87
        $region38: #{tpu_custom_call.1} parent=35 // pred_check_branch
          %344 = sbr.rel (%p342) target = $region40
        $region39: #{tpu_custom_call.1} parent=35 // pred_region
          %s345 = sand.u32 %s72, 1
          %s346 = scalar_lea.sflag [#allocation3], %s345
          %s347 = sand.u32 %s72, 1
          %s348 = smul.addr %s347, 2
          %s349 = scalar_lea.vmem [#allocation2], %s348
          %350 = dma.done %s346, 32
        $region40: #{tpu_custom_call.1} parent=35 // pred_fallthru
          _
      $region36: #{tpu_custom_call.1} parent=5 // pred_fallthru
        _
    $region6: #{tpu_custom_call.1} parent=1 // loop_footer
      %s15 = sadd.s32 1, %s11
    $region7: #{tpu_custom_call.1} parent=1 // loop_footer_branch
      %10 = sbr.rel target = $region3
    $region8: #{tpu_custom_call.1} parent=1 // loop_exit
      _
    %351 = vsyncpa [#allocation3], 1
    %s352 = scalar_lea.sflag [#allocation3], 1
    %353 = vsyncpa %s352, 1

</llo_original>
